<compile_context>
chip_gen: v5e
topology: v5e:2x2
jax: 0.10.0
libtpu: 0.0.40
codegen_flags: <defaults>
</compile_context>

<pallas_src>
import math
from functools import partial

import jax
import jax.numpy as jnp
from jax.experimental import pallas as pl
from jax.experimental.pallas import tpu as pltpu


def _round_up(x, m):
    return ((x + m - 1) // m) * m


def _cdiv(a, b):
    return -(-a // b)


def _pad2d(x, rows, cols):
    pr = rows - x.shape[0]
    pc = cols - x.shape[1]
    if pr or pc:
        x = jnp.pad(x, ((0, pr), (0, pc)))
    return x


def _chip_config():
    """(tm_max, tk_max, vmem_capacity_bytes) chosen from the chip's VMEM size."""
    try:
        vmem_cap = pltpu.get_tpu_info().vmem_capacity_bytes
    except Exception:
        vmem_cap = 64 * 1024 * 1024            # conservative (v7x-sized) fallback
    if vmem_cap >= 100 * 1024 * 1024:          # v5e / v6e: 128 MiB physical VMEM
        return 2048, 512, vmem_cap
    return 1024, 512, vmem_cap                 # v7x: 64 MiB physical VMEM


def _pick_tm(n, tm_max):
    """Row tile: multiple of 16 (bf16 sublane packing); keep >= 2 row tiles for
    mid-size graphs so the 'parallel' row axis feeds both v7x TensorCores."""
    tm = min(tm_max, _round_up(n, 16))
    while tm > 256 and _cdiv(n, tm) < 2:
        tm = _round_up(tm // 2, 16)
    return max(tm, 16)


def _vmem_limit(bytes_needed, vmem_cap):
    """Scoped-VMEM limit derived from the actual tile footprint (+ headroom)."""
    limit = bytes_needed + bytes_needed // 4 + (4 << 20)
    limit = max(limit, 16 << 20)
    return int(min(limit, int(vmem_cap * 0.9)))


# ---------------------------------------------------------------------------
# Kernel 1: support = feature @ W
#   grid = (row tiles over nodes, k tiles over in_features); f32 accumulator.
# ---------------------------------------------------------------------------
def _support_kernel(feat_ref, w_ref, sup_ref, acc_ref):
    k = pl.program_id(1)

    @pl.when(k == 0)
    def _():
        acc_ref[...] = jnp.zeros_like(acc_ref)

    acc_ref[...] += jnp.dot(feat_ref[...], w_ref[...],
                            preferred_element_type=jnp.float32)

    @pl.when(k == pl.num_programs(1) - 1)
    def _():
        sup_ref[...] = acc_ref[...].astype(sup_ref.dtype)


# ---------------------------------------------------------------------------
# Kernel 2: out = sigmoid(adjacency @ support + bias)
#   grid = (row tiles, k tiles).  The f32 output block (constant block index
#   across k) is the accumulator; bias is folded into the k==0 init.
#   `resident=True`: support is a single full-array VMEM block, sliced per k.
# ---------------------------------------------------------------------------
def _gcn_adj_kernel(adj_ref, sup_ref, b_ref, out_ref, *, tk, resident):
    k = pl.program_id(1)

    @pl.when(k == 0)
    def _():
        out_ref[...] = pl.broadcast_to(b_ref[...], out_ref.shape)

    if resident:
        sup = sup_ref[pl.ds(pl.multiple_of(k * tk, tk), tk), :]
    else:
        sup = sup_ref[...]

    out_ref[...] += jnp.dot(adj_ref[...], sup,
                            preferred_element_type=jnp.float32)

    @pl.when(k == pl.num_programs(1) - 1)
    def _():
        x = out_ref[...]
        # sigmoid(x) = 1 / (1 + exp(-x)); exp and reciprocal both hit the EUP.
        out_ref[...] = pl.reciprocal(1.0 + jnp.exp(-x), approx=True)


def gcn_net(adjacency, feature, weight, bias, *, tm=None, tk=None, resident=None):
    """sigmoid(adjacency @ (feature @ weight) + bias) with tiled Pallas kernels."""
    n = adjacency.shape[0]
    in_f, out_f = weight.shape

    tm_max, tk_max, vmem_cap = _chip_config()

    # ---- tile selection ------------------------------------------------------
    tm = _pick_tm(n, tm_max) if tm is None else max(16, _round_up(tm, 16))
    tk = (min(tk_max, _round_up(n, 128)) if tk is None
          else max(128, _round_up(tk, 128)))

    out_f_p = _round_up(out_f, 128)           # lane-dense output channels

    # Kernel 1 tiles (decoupled from kernel 2's tk).
    in_f_p0 = _round_up(in_f, 128)
    tk1 = in_f_p0 if in_f_p0 <= 2048 else 1024     # contraction tile over in_f
    in_f_p = _round_up(in_f, tk1)
    tm1 = min(512, _round_up(n, 128))              # node-row tile for kernel 1

    # Padded node counts: nc must be divisible by both tm1 (kernel 1 rows) and
    # tk (kernel 2 contraction); nr by tm.  Zero padding contributes zeros.
    nc = _round_up(n, (tm1 * tk) // math.gcd(tm1, tk))
    nr = _round_up(n, tm)

    cdt = jnp.bfloat16
    adj_p = _pad2d(adjacency.astype(cdt), nr, nc)
    feat_p = _pad2d(feature.astype(cdt), nc, in_f_p)
    w_p = _pad2d(weight.astype(cdt), in_f_p, out_f_p)
    b_p = jnp.pad(bias.astype(jnp.float32), (0, out_f_p - out_f)).reshape(1, out_f_p)

    # ---- kernel 1: support = feature @ W ------------------------------------
    n_k1 = in_f_p // tk1
    k1_bytes = ((tm1 * tk1 + tk1 * out_f_p + tm1 * out_f_p) * 2) * 2 \
               + tm1 * out_f_p * 4
    support = pl.pallas_call(
        _support_kernel,
        out_shape=jax.ShapeDtypeStruct((nc, out_f_p), cdt),
        grid_spec=pltpu.PrefetchScalarGridSpec(
            num_scalar_prefetch=0,
            grid=(nc // tm1, n_k1),
            in_specs=[
                pl.BlockSpec((tm1, tk1), lambda i, k: (i, k)),
                pl.BlockSpec((tk1, out_f_p), lambda i, k: (k, 0)),
            ],
            out_specs=pl.BlockSpec((tm1, out_f_p), lambda i, k: (i, 0)),
            scratch_shapes=[pltpu.VMEM((tm1, out_f_p), jnp.float32)],
        ),
        compiler_params=pltpu.CompilerParams(
            dimension_semantics=("parallel", "arbitrary"),
            vmem_limit_bytes=_vmem_limit(k1_bytes, vmem_cap),
        ),
        cost_estimate=pl.CostEstimate(
            flops=2 * nc * in_f_p * out_f_p,
            transcendentals=0,
            bytes_accessed=(nc * in_f_p
                            + (nc // tm1) * in_f_p * out_f_p
                            + nc * out_f_p) * 2,
        ),
    )(feat_p, w_p)

    # ---- kernel 2: out = sigmoid(adjacency @ support + bias) ----------------
    n_row = nr // tm
    n_k = nc // tk

    adj_tile_b = tm * tk * 2 * 2             # bf16, double-buffered
    out_tile_b = tm * out_f_p * 4 * 2        # f32 accumulator block, 2 buffers
    bias_b = out_f_p * 4 * 2
    sup_res_b = nc * out_f_p * 2 * 2         # resident support (assume 2 bufs)
    sup_str_b = tk * out_f_p * 2 * 2         # streamed support tile, 2 buffers

    if resident is None:
        resident = (adj_tile_b + out_tile_b + bias_b + sup_res_b
                    <= int(vmem_cap * 0.55))

    if resident:
        sup_spec = pl.BlockSpec((nc, out_f_p), lambda i, k: (0, 0))
        sup_hbm_bytes = nc * out_f_p * 2               # fetched exactly once
        k2_bytes = adj_tile_b + out_tile_b + bias_b + sup_res_b
    else:
        sup_spec = pl.BlockSpec((tk, out_f_p), lambda i, k: (k, 0))
        sup_hbm_bytes = n_row * nc * out_f_p * 2       # re-read per row tile
        k2_bytes = adj_tile_b + out_tile_b + bias_b + sup_str_b

    out_p = pl.pallas_call(
        partial(_gcn_adj_kernel, tk=tk, resident=resident),
        out_shape=jax.ShapeDtypeStruct((nr, out_f_p), jnp.float32),
        grid_spec=pltpu.PrefetchScalarGridSpec(
            num_scalar_prefetch=0,
            grid=(n_row, n_k),
            in_specs=[
                pl.BlockSpec((tm, tk), lambda i, k: (i, k)),
                sup_spec,
                pl.BlockSpec((1, out_f_p), lambda i, k: (0, 0)),
            ],
            out_specs=pl.BlockSpec((tm, out_f_p), lambda i, k: (i, 0)),
        ),
        compiler_params=pltpu.CompilerParams(
            dimension_semantics=("parallel", "arbitrary"),
            vmem_limit_bytes=_vmem_limit(k2_bytes, vmem_cap),
        ),
        cost_estimate=pl.CostEstimate(
            flops=2 * nr * nc * out_f_p,
            transcendentals=2 * nr * out_f_p,          # exp + reciprocal
            bytes_accessed=nr * nc * 2 + sup_hbm_bytes + nr * out_f_p * 4,
        ),
    )(adj_p, support, b_p)

    return out_p[:n, :out_f]


def init_params(key, in_features, out_features):
    """Deterministic kaiming_uniform_ (PyTorch default args) for weight, zeros for bias."""
    # torch.nn.init.kaiming_uniform_: gain = sqrt(2); fan_in = tensor.size(1),
    # which for a (in_features, out_features) weight is out_features.
    fan_in = out_features
    bound = math.sqrt(2.0) * math.sqrt(3.0 / fan_in)
    weight = jax.random.uniform(
        key, (in_features, out_features), dtype=jnp.float32,
        minval=-bound, maxval=bound)
    bias = jnp.zeros((out_features,), dtype=jnp.float32)
    return weight, bias


def _bf16_reference(adjacency, feature, weight, bias):
    """Pure-JAX reference reproducing the kernel's bf16-input / f32-accumulate numerics."""
    hp = jax.lax.Precision.HIGHEST
    adj_b = adjacency.astype(jnp.bfloat16).astype(jnp.float32)
    feat_b = feature.astype(jnp.bfloat16).astype(jnp.float32)
    w_b = weight.astype(jnp.bfloat16).astype(jnp.float32)
    sup = jnp.dot(feat_b, w_b, precision=hp)
    sup = sup.astype(jnp.bfloat16).astype(jnp.float32)
    return jax.nn.sigmoid(jnp.dot(adj_b, sup, precision=hp) + bias)


if __name__ == "__main__":
    # Small shapes consistent with the module's forward:
    #   adjacency: (N, N), feature: (N, in_features)
    n_nodes = 8
    in_features = 64
    out_features = 32

    key = jax.random.PRNGKey(0)
    k_adj, k_feat, k_w = jax.random.split(key, 3)

    adjacency = jax.random.uniform(k_adj, (n_nodes, n_nodes), dtype=jnp.float32)
    feature = jax.random.normal(k_feat, (n_nodes, in_features), dtype=jnp.float32)
    weight, bias = init_params(k_w, in_features, out_features)

    out = jax.block_until_ready(gcn_net(adjacency, feature, weight, bias))
    assert out.shape == (n_nodes, out_features)

    ref = _bf16_reference(adjacency, feature, weight, bias)
    assert jnp.allclose(out, ref, atol=5e-3, rtol=5e-3)

    # Pure-f32 sanity check (sigmoid output is bounded so bf16 error stays small).
    hp = jax.lax.Precision.HIGHEST
    ref_f32 = jax.nn.sigmoid(
        jnp.dot(adjacency, jnp.dot(feature, weight, precision=hp), precision=hp) + bias)
    assert jnp.allclose(out, ref_f32, atol=3e-2)

    # Non-aligned shape with small forced tiles to exercise the multi-tile
    # (row, k) grid, in-output accumulation, padding/slicing — and BOTH the
    # VMEM-resident and the streamed support paths.
    n2, in2, out2 = 260, 96, 72
    k_adj2, k_feat2, k_w2 = jax.random.split(jax.random.PRNGKey(1), 3)
    adj2 = jax.random.uniform(k_adj2, (n2, n2), dtype=jnp.float32)
    feat2 = jax.random.normal(k_feat2, (n2, in2), dtype=jnp.float32)
    w2, b2 = init_params(k_w2, in2, out2)
    ref2 = _bf16_reference(adj2, feat2, w2, b2)

    out2_res = jax.block_until_ready(
        gcn_net(adj2, feat2, w2, b2, tm=128, tk=128, resident=True))
    assert out2_res.shape == (n2, out2)
    assert jnp.allclose(out2_res, ref2, atol=5e-3, rtol=5e-3)

    out2_str = jax.block_until_ready(
        gcn_net(adj2, feat2, w2, b2, tm=128, tk=128, resident=False))
    assert jnp.allclose(out2_str, ref2, atol=5e-3, rtol=5e-3)

    print("KERNEL_OK")
</pallas_src>

<mosaic_0001>
module attributes {stable_mosaic.version = 11 : i64} {
  func.func @_support_kernel(%arg0: i32, %arg1: i32, %arg2: memref<128x128xbf16, #tpu.memory_space<vmem>>, %arg3: memref<128x128xbf16, #tpu.memory_space<vmem>>, %arg4: memref<128x128xbf16, #tpu.memory_space<vmem>>, %arg5: memref<128x128xf32, #tpu.memory_space<vmem>>) attributes {dimension_semantics = [#tpu.dimension_semantics<parallel>, #tpu.dimension_semantics<arbitrary>], iteration_bounds = array<i64: 1, 1>, scalar_prefetch = 0 : i64, scratch_operands = 1 : i64, tpu.core_type = #tpu.core_type<tc>, window_params = [{transform_indices = @transform_0, window_bounds = array<i64: 128, 128>}, {transform_indices = @transform_1, window_bounds = array<i64: 128, 128>}, {transform_indices = @transform_2, window_bounds = array<i64: 128, 128>}]} {
    %c0_i32 = arith.constant 0 : i32
    %0 = arith.cmpi eq, %arg1, %c0_i32 : i32
    %1 = arith.extui %0 : i1 to i32
    %c0_i32_0 = arith.constant 0 : i32
    %2 = arith.cmpi ne, %1, %c0_i32_0 : i32
    scf.if %2 {
      %cst_10 = arith.constant 0.000000e+00 : f32
      %12 = vector.broadcast %cst_10 : f32 to vector<128x128xf32>
      %c0_11 = arith.constant 0 : index
      %c0_12 = arith.constant 0 : index
      %13 = vector.load %arg5[%c0_11, %c0_12] : memref<128x128xf32, #tpu.memory_space<vmem>>, vector<128x128xf32>
      tpu.vector_store %arg5[%c0_11, %c0_12], %12 {strides = array<i32>} : memref<128x128xf32, #tpu.memory_space<vmem>>, vector<128x128xf32>,
    } else {
    }
    %c0 = arith.constant 0 : index
    %c0_1 = arith.constant 0 : index
    %3 = vector.load %arg5[%c0, %c0_1] : memref<128x128xf32, #tpu.memory_space<vmem>>, vector<128x128xf32>
    %c0_2 = arith.constant 0 : index
    %c0_3 = arith.constant 0 : index
    %4 = vector.load %arg2[%c0_2, %c0_3] : memref<128x128xbf16, #tpu.memory_space<vmem>>, vector<128x128xbf16>
    %c0_4 = arith.constant 0 : index
    %c0_5 = arith.constant 0 : index
    %5 = vector.load %arg3[%c0_4, %c0_5] : memref<128x128xbf16, #tpu.memory_space<vmem>>, vector<128x128xbf16>
    %cst = arith.constant dense<0.000000e+00> : vector<128x128xf32>
    %6 = tpu.matmul %4, %5, %cst {dimension_numbers = #tpu.dot_dimension_numbers<[1], [0], [0], [1], [0, 0, 1, 1], [], []>} : vector<128x128xbf16>, vector<128x128xbf16>, vector<128x128xf32> -> vector<128x128xf32>
    %7 = arith.addf %3, %6 : vector<128x128xf32>
    %c0_6 = arith.constant 0 : index
    %c0_7 = arith.constant 0 : index
    %8 = vector.load %arg5[%c0_6, %c0_7] : memref<128x128xf32, #tpu.memory_space<vmem>>, vector<128x128xf32>
    tpu.vector_store %arg5[%c0_6, %c0_7], %7 {strides = array<i32>} : memref<128x128xf32, #tpu.memory_space<vmem>>, vector<128x128xf32>,
    %c0_i32_8 = arith.constant 0 : i32
    %9 = arith.cmpi eq, %arg1, %c0_i32_8 : i32
    %10 = arith.extui %9 : i1 to i32
    %c0_i32_9 = arith.constant 0 : i32
    %11 = arith.cmpi ne, %10, %c0_i32_9 : i32
    scf.if %11 {
      %c0_10 = arith.constant 0 : index
      %c0_11 = arith.constant 0 : index
      %12 = vector.load %arg5[%c0_10, %c0_11] : memref<128x128xf32, #tpu.memory_space<vmem>>, vector<128x128xf32>
      %13 = arith.truncf %12 : vector<128x128xf32> to vector<128x128xbf16>
      %c0_12 = arith.constant 0 : index
      %c0_13 = arith.constant 0 : index
      %14 = vector.load %arg4[%c0_12, %c0_13] : memref<128x128xbf16, #tpu.memory_space<vmem>>, vector<128x128xbf16>
      tpu.vector_store %arg4[%c0_12, %c0_13], %13 {strides = array<i32>} : memref<128x128xbf16, #tpu.memory_space<vmem>>, vector<128x128xbf16>,
    } else {
    }
    return
  }
  func.func @transform_0(%arg0: i32, %arg1: i32) -> (i32, i32) {
    %c0_i32 = arith.constant 0 : i32
    return %arg0, %arg1 : i32, i32
  }
  func.func @transform_1(%arg0: i32, %arg1: i32) -> (i32, i32) {
    %c0_i32 = arith.constant 0 : i32
    %c0_i32_0 = arith.constant 0 : i32
    return %arg1, %c0_i32 : i32, i32
  }
  func.func @transform_2(%arg0: i32, %arg1: i32) -> (i32, i32) {
    %c0_i32 = arith.constant 0 : i32
    %c0_i32_0 = arith.constant 0 : i32
    return %arg0, %c0_i32 : i32, i32
  }
}

</mosaic_0001>

<llo_original>
// kernel: tpu_custom_call.1
$region0: #{tpu_custom_call.1}
  #allocation0 [shape = 'u32[]', space=smem, size = 0x4, offset = 0x4, fixed_abs, tag = 'smem constant byte address 0x4 - core index']
  #allocation1 [shape = 'u32[72,128]{1,0:T(1,128)}', space=vmem, size = 0x9000, scoped, tag = 'internal scratch']
  #allocation2 [shape = 'f32[128,128]{1,0:T(8,128)}', space=vmem, size = 0x10000, scoped, tag = 'scratch operand']
  %s0 = inlined_call_operand.hbm [shape: bf16[128,128], index: 0, kind: input, shape index: {}]
  %s1 = inlined_call_operand.hbm [shape: bf16[128,128], index: 1, kind: input, shape index: {}]
  %s2 = inlined_call_operand.hbm [shape: bf16[128,128], index: 2, kind: output, shape index: {}]
  %s3 = sld [smem:[#allocation0]]
  $region34: #{tpu_custom_call.1} parent=0
    _
  %s5 = ssub.s32 1, %s3
  %s6 = scalar_select 0, %s5, %s3
  $region1: #{tpu_custom_call.1} parent=0
    #allocation3 [shape = 'u8[32768]{0}', space=vmem, size = 0x8000, scoped, tag = 'input window, operand 0, single buffered']
    #allocation4 [shape = 's32[1]{0}', space=sflag, size = 0x4, scoped, tag = 'scoped memory for tpu_custom_call.1']
    #allocation5 [shape = 's32[1]{0}', space=sflag, size = 0x4, scoped, tag = 'scoped memory for tpu_custom_call.1']
    #allocation6 [shape = 'u8[32768]{0}', space=vmem, size = 0x8000, scoped, tag = 'input window, operand 1, single buffered']
    #allocation7 [shape = 's32[1]{0}', space=sflag, size = 0x4, scoped, tag = 'scoped memory for tpu_custom_call.1']
    #allocation8 [shape = 'u8[32768]{0}', space=vmem, size = 0x8000, scoped, tag = 'output window, operand 0, single buffered']
    %7 = vsyncpa [#allocation4], 0
    %8 = vsyncpa [#allocation7], 0
    %9 = vsyncpa [#allocation5], 0
    // Predicated region
    $region2: #{tpu_custom_call.1} parent=1 // pred_check
      _
    $region3: #{tpu_custom_call.1} parent=1 // pred_check_branch
      %11 = sbr.rel (0) target = $region5
    $region4: #{tpu_custom_call.1} parent=1 // pred_region
      %13 = vsyncadd [#allocation4], 0
      %s14 = sshll.u32 %s0, 4
      %s15 = int_to_ptr.hbm [resolvable:$true] %s14
      %s16 = sshll.u32 [#allocation3], 4
      %s17 = int_to_ptr.vmem [resolvable:$true] %s16
      %22 = dma.hbm_to_vmem [thread:$0]  %s15, 1024, %s17, [#allocation4], 64, 64, 4
    $region5: #{tpu_custom_call.1} parent=1 // pred_fallthru
      _
    // Predicated region
    $region6: #{tpu_custom_call.1} parent=1 // pred_check
      _
    $region7: #{tpu_custom_call.1} parent=1 // pred_check_branch
      %24 = sbr.rel (0) target = $region9
    $region8: #{tpu_custom_call.1} parent=1 // pred_region
      %26 = vsyncadd [#allocation7], 0
      %s27 = sshll.u32 %s1, 4
      %s28 = int_to_ptr.hbm [resolvable:$true] %s27
      %s29 = sshll.u32 [#allocation6], 4
      %s30 = int_to_ptr.vmem [resolvable:$true] %s29
      %35 = dma.hbm_to_vmem [thread:$0]  %s28, 1024, %s30, [#allocation7], 64, 64, 4
    $region9: #{tpu_custom_call.1} parent=1 // pred_fallthru
      _
    // Predicated region
    $region10: #{tpu_custom_call.1} parent=1 // pred_check
      _
    $region11: #{tpu_custom_call.1} parent=1 // pred_check_branch
      %37 = sbr.rel (0) target = $region13
    $region12: #{tpu_custom_call.1} parent=1 // pred_region
      %39 = dma.done [#allocation4], 1024
    $region13: #{tpu_custom_call.1} parent=1 // pred_fallthru
      _
    // Predicated region
    $region14: #{tpu_custom_call.1} parent=1 // pred_check
      _
    $region15: #{tpu_custom_call.1} parent=1 // pred_check_branch
      %41 = sbr.rel (0) target = $region17
    $region16: #{tpu_custom_call.1} parent=1 // pred_region
      %43 = dma.done [#allocation7], 1024
    $region17: #{tpu_custom_call.1} parent=1 // pred_fallthru
      _
    %p44 = scmp.eq.s32.totalorder 0, 0
    // Predicated region
    $region18: #{tpu_custom_call.1} parent=1 // pred_check
      %p45 = pneg %p44
    $region19: #{tpu_custom_call.1} parent=1 // pred_check_branch
      %47 = sbr.rel (%p45) target = $region21
    $region20: #{tpu_custom_call.1} parent=1 // pred_region
      %48 = vst [vmem:[#allocation2] sm:$0xff] 0.0
      %49 = vst [vmem:[#allocation2 + $0x8] sm:$0xff] 0.0
      %50 = vst [vmem:[#allocation2 + $0x10] sm:$0xff] 0.0
      %51 = vst [vmem:[#allocation2 + $0x18] sm:$0xff] 0.0
      %52 = vst [vmem:[#allocation2 + $0x20] sm:$0xff] 0.0
      %53 = vst [vmem:[#allocation2 + $0x28] sm:$0xff] 0.0
      %54 = vst [vmem:[#allocation2 + $0x30] sm:$0xff] 0.0
      %55 = vst [vmem:[#allocation2 + $0x38] sm:$0xff] 0.0
      %56 = vst [vmem:[#allocation2 + $0x40] sm:$0xff] 0.0
      %57 = vst [vmem:[#allocation2 + $0x48] sm:$0xff] 0.0
      %58 = vst [vmem:[#allocation2 + $0x50] sm:$0xff] 0.0
      %59 = vst [vmem:[#allocation2 + $0x58] sm:$0xff] 0.0
      %60 = vst [vmem:[#allocation2 + $0x60] sm:$0xff] 0.0
      %61 = vst [vmem:[#allocation2 + $0x68] sm:$0xff] 0.0
      %62 = vst [vmem:[#allocation2 + $0x70] sm:$0xff] 0.0
      %63 = vst [vmem:[#allocation2 + $0x78] sm:$0xff] 0.0
    $region21: #{tpu_custom_call.1} parent=1 // pred_fallthru
      _
    %v64 = vld [vmem:[#allocation2] sm:$0xff]
    %v65 = vld [vmem:[#allocation2 + $0x8] sm:$0xff]
    %v66 = vld [vmem:[#allocation2 + $0x10] sm:$0xff]
    %v67 = vld [vmem:[#allocation2 + $0x18] sm:$0xff]
    %v68 = vld [vmem:[#allocation2 + $0x20] sm:$0xff]
    %v69 = vld [vmem:[#allocation2 + $0x28] sm:$0xff]
    %v70 = vld [vmem:[#allocation2 + $0x30] sm:$0xff]
    %v71 = vld [vmem:[#allocation2 + $0x38] sm:$0xff]
    %v72 = vld [vmem:[#allocation2 + $0x40] sm:$0xff]
    %v73 = vld [vmem:[#allocation2 + $0x48] sm:$0xff]
    %v74 = vld [vmem:[#allocation2 + $0x50] sm:$0xff]
    %v75 = vld [vmem:[#allocation2 + $0x58] sm:$0xff]
    %v76 = vld [vmem:[#allocation2 + $0x60] sm:$0xff]
    %v77 = vld [vmem:[#allocation2 + $0x68] sm:$0xff]
    %v78 = vld [vmem:[#allocation2 + $0x70] sm:$0xff]
    %v79 = vld [vmem:[#allocation2 + $0x78] sm:$0xff]
    %v80 = vld [vmem:[#allocation3] sm:$0xf]
    %v81 = vld [vmem:[#allocation3 + $0x4] sm:$0xf]
    %v82 = vld [vmem:[#allocation3 + $0x8] sm:$0xf]
    %v83 = vld [vmem:[#allocation3 + $0xc] sm:$0xf]
    %v84 = vld [vmem:[#allocation3 + $0x10] sm:$0xf]
    %v85 = vld [vmem:[#allocation3 + $0x14] sm:$0xf]
    %v86 = vld [vmem:[#allocation3 + $0x18] sm:$0xf]
    %v87 = vld [vmem:[#allocation3 + $0x1c] sm:$0xf]
    %v88 = vld [vmem:[#allocation3 + $0x20] sm:$0xf]
    %v89 = vld [vmem:[#allocation3 + $0x24] sm:$0xf]
    %v90 = vld [vmem:[#allocation3 + $0x28] sm:$0xf]
    %v91 = vld [vmem:[#allocation3 + $0x2c] sm:$0xf]
    %v92 = vld [vmem:[#allocation3 + $0x30] sm:$0xf]
    %v93 = vld [vmem:[#allocation3 + $0x34] sm:$0xf]
    %v94 = vld [vmem:[#allocation3 + $0x38] sm:$0xf]
    %v95 = vld [vmem:[#allocation3 + $0x3c] sm:$0xf]
    %v96 = vld [vmem:[#allocation6] sm:$0xf]
    %v97 = vld [vmem:[#allocation6 + $0x4] sm:$0xf]
    %v98 = vld [vmem:[#allocation6 + $0x8] sm:$0xf]
    %v99 = vld [vmem:[#allocation6 + $0xc] sm:$0xf]
    %v100 = vld [vmem:[#allocation6 + $0x10] sm:$0xf]
    %v101 = vld [vmem:[#allocation6 + $0x14] sm:$0xf]
    %v102 = vld [vmem:[#allocation6 + $0x18] sm:$0xf]
    %v103 = vld [vmem:[#allocation6 + $0x1c] sm:$0xf]
    %v104 = vld [vmem:[#allocation6 + $0x20] sm:$0xf]
    %v105 = vld [vmem:[#allocation6 + $0x24] sm:$0xf]
    %v106 = vld [vmem:[#allocation6 + $0x28] sm:$0xf]
    %v107 = vld [vmem:[#allocation6 + $0x2c] sm:$0xf]
    %v108 = vld [vmem:[#allocation6 + $0x30] sm:$0xf]
    %v109 = vld [vmem:[#allocation6 + $0x34] sm:$0xf]
    %v110 = vld [vmem:[#allocation6 + $0x38] sm:$0xf]
    %v111 = vld [vmem:[#allocation6 + $0x3c] sm:$0xf]
    %v128 = vunpack.c.l.b16 %v80
    %v129 = vunpack.c.l.b16 %v81
    %v130 = vunpack.c.l.b16 %v82
    %v131 = vunpack.c.l.b16 %v83
    %v132 = vunpack.c.l.b16 %v84
    %v133 = vunpack.c.l.b16 %v85
    %v134 = vunpack.c.l.b16 %v86
    %v135 = vunpack.c.l.b16 %v87
    %v136 = vunpack.c.l.b16 %v88
    %v137 = vunpack.c.l.b16 %v89
    %v138 = vunpack.c.l.b16 %v90
    %v139 = vunpack.c.l.b16 %v91
    %v140 = vunpack.c.l.b16 %v92
    %v141 = vunpack.c.l.b16 %v93
    %v142 = vunpack.c.l.b16 %v94
    %v143 = vunpack.c.l.b16 %v95
    %v144 = vpack.c.b16 %v129, %v128
    %v145 = vpack.c.b16 %v131, %v130
    %v146 = vpack.c.b16 %v133, %v132
    %v147 = vpack.c.b16 %v135, %v134
    %v148 = vpack.c.b16 %v137, %v136
    %v149 = vpack.c.b16 %v139, %v138
    %v150 = vpack.c.b16 %v141, %v140
    %v151 = vpack.c.b16 %v143, %v142
    %v176 = vunpack.c.l.b16 %v96
    %v177 = vunpack.c.l.b16 %v97
    %v178 = vunpack.c.l.b16 %v98
    %v179 = vunpack.c.l.b16 %v99
    %v180 = vunpack.c.l.b16 %v100
    %v181 = vunpack.c.l.b16 %v101
    %v182 = vunpack.c.l.b16 %v102
    %v183 = vunpack.c.l.b16 %v103
    %v184 = vunpack.c.l.b16 %v104
    %v185 = vunpack.c.l.b16 %v105
    %v186 = vunpack.c.l.b16 %v106
    %v187 = vunpack.c.l.b16 %v107
    %v188 = vunpack.c.l.b16 %v108
    %v189 = vunpack.c.l.b16 %v109
    %v190 = vunpack.c.l.b16 %v110
    %v191 = vunpack.c.l.b16 %v111
    %v192 = vpack.c.b16 %v177, %v176
    %v193 = vpack.c.b16 %v179, %v178
    %v194 = vpack.c.b16 %v181, %v180
    %v195 = vpack.c.b16 %v183, %v182
    %v196 = vpack.c.b16 %v185, %v184
    %v197 = vpack.c.b16 %v187, %v186
    %v198 = vpack.c.b16 %v189, %v188
    %v199 = vpack.c.b16 %v191, %v190
    %208 = vmatpush.bf16.msra.mxu0 %v199
    %209 = vmatpush.bf16.msra.mxu0 %v198
    %210 = vmatpush.bf16.msra.mxu0 %v197
    %211 = vmatpush.bf16.msra.mxu0 %v196
    %212 = vmatpush.bf16.msra.mxu0 %v195
    %213 = vmatpush.bf16.msra.mxu0 %v194
    %214 = vmatpush.bf16.msra.mxu0 %v193
    %215 = vmatpush.bf16.msra.mxu0 %v192
    %216 = vmatmul.bf16.gmra.mxu0 %v144
    %v217 = vpop.f32.mrf.mxu0
    %v218 = vadd.f32 0.0, %v217
    %v219 = vpop.f32.mrf.mxu0
    %v220 = vadd.f32 0.0, %v219
    %221 = vmatmul.bf16.gmra.mxu0 %v145
    %v222 = vpop.f32.mrf.mxu0
    %v223 = vadd.f32 0.0, %v222
    %v224 = vpop.f32.mrf.mxu0
    %v225 = vadd.f32 0.0, %v224
    %226 = vmatmul.bf16.gmra.mxu0 %v146
    %v227 = vpop.f32.mrf.mxu0
    %v228 = vadd.f32 0.0, %v227
    %v229 = vpop.f32.mrf.mxu0
    %v230 = vadd.f32 0.0, %v229
    %231 = vmatmul.bf16.gmra.mxu0 %v147
    %v232 = vpop.f32.mrf.mxu0
    %v233 = vadd.f32 0.0, %v232
    %v234 = vpop.f32.mrf.mxu0
    %v235 = vadd.f32 0.0, %v234
    %236 = vmatmul.bf16.gmra.mxu0 %v148
    %v237 = vpop.f32.mrf.mxu0
    %v238 = vadd.f32 0.0, %v237
    %v239 = vpop.f32.mrf.mxu0
    %v240 = vadd.f32 0.0, %v239
    %241 = vmatmul.bf16.gmra.mxu0 %v149
    %v242 = vpop.f32.mrf.mxu0
    %v243 = vadd.f32 0.0, %v242
    %v244 = vpop.f32.mrf.mxu0
    %v245 = vadd.f32 0.0, %v244
    %246 = vmatmul.bf16.gmra.mxu0 %v150
    %v247 = vpop.f32.mrf.mxu0
    %v248 = vadd.f32 0.0, %v247
    %v249 = vpop.f32.mrf.mxu0
    %v250 = vadd.f32 0.0, %v249
    %251 = vmatmul.bf16.gmra.mxu0 %v151
    %v252 = vpop.f32.mrf.mxu0
    %v253 = vadd.f32 0.0, %v252
    %v254 = vpop.f32.mrf.mxu0
    %v255 = vadd.f32 0.0, %v254
    %256 = vdwg.mxu0
    %v257 = vadd.f32 %v64, %v218
    %v258 = vadd.f32 %v65, %v220
    %v259 = vadd.f32 %v66, %v223
    %v260 = vadd.f32 %v67, %v225
    %v261 = vadd.f32 %v68, %v228
    %v262 = vadd.f32 %v69, %v230
    %v263 = vadd.f32 %v70, %v233
    %v264 = vadd.f32 %v71, %v235
    %v265 = vadd.f32 %v72, %v238
    %v266 = vadd.f32 %v73, %v240
    %v267 = vadd.f32 %v74, %v243
    %v268 = vadd.f32 %v75, %v245
    %v269 = vadd.f32 %v76, %v248
    %v270 = vadd.f32 %v77, %v250
    %v271 = vadd.f32 %v78, %v253
    %v272 = vadd.f32 %v79, %v255
    %273 = vst [vmem:[#allocation2] sm:$0xff] %v257
    %274 = vst [vmem:[#allocation2 + $0x8] sm:$0xff] %v258
    %275 = vst [vmem:[#allocation2 + $0x10] sm:$0xff] %v259
    %276 = vst [vmem:[#allocation2 + $0x18] sm:$0xff] %v260
    %277 = vst [vmem:[#allocation2 + $0x20] sm:$0xff] %v261
    %278 = vst [vmem:[#allocation2 + $0x28] sm:$0xff] %v262
    %279 = vst [vmem:[#allocation2 + $0x30] sm:$0xff] %v263
    %280 = vst [vmem:[#allocation2 + $0x38] sm:$0xff] %v264
    %281 = vst [vmem:[#allocation2 + $0x40] sm:$0xff] %v265
    %282 = vst [vmem:[#allocation2 + $0x48] sm:$0xff] %v266
    %283 = vst [vmem:[#allocation2 + $0x50] sm:$0xff] %v267
    %284 = vst [vmem:[#allocation2 + $0x58] sm:$0xff] %v268
    %285 = vst [vmem:[#allocation2 + $0x60] sm:$0xff] %v269
    %286 = vst [vmem:[#allocation2 + $0x68] sm:$0xff] %v270
    %287 = vst [vmem:[#allocation2 + $0x70] sm:$0xff] %v271
    %288 = vst [vmem:[#allocation2 + $0x78] sm:$0xff] %v272
    // Predicated region
    $region22: #{tpu_custom_call.1} parent=1 // pred_check
      %p289 = pneg %p44
    $region23: #{tpu_custom_call.1} parent=1 // pred_check_branch
      %291 = sbr.rel (%p289) target = $region25
    $region24: #{tpu_custom_call.1} parent=1 // pred_region
      %v292 = vld [vmem:[#allocation2] sm:$0xff]
      %v293 = vld [vmem:[#allocation2 + $0x8] sm:$0xff]
      %v294 = vld [vmem:[#allocation2 + $0x10] sm:$0xff]
      %v295 = vld [vmem:[#allocation2 + $0x18] sm:$0xff]
      %v296 = vld [vmem:[#allocation2 + $0x20] sm:$0xff]
      %v297 = vld [vmem:[#allocation2 + $0x28] sm:$0xff]
      %v298 = vld [vmem:[#allocation2 + $0x30] sm:$0xff]
      %v299 = vld [vmem:[#allocation2 + $0x38] sm:$0xff]
      %v300 = vld [vmem:[#allocation2 + $0x40] sm:$0xff]
      %v301 = vld [vmem:[#allocation2 + $0x48] sm:$0xff]
      %v302 = vld [vmem:[#allocation2 + $0x50] sm:$0xff]
      %v303 = vld [vmem:[#allocation2 + $0x58] sm:$0xff]
      %v304 = vld [vmem:[#allocation2 + $0x60] sm:$0xff]
      %v305 = vld [vmem:[#allocation2 + $0x68] sm:$0xff]
      %v306 = vld [vmem:[#allocation2 + $0x70] sm:$0xff]
      %v307 = vld [vmem:[#allocation2 + $0x78] sm:$0xff]
      %v308 = vpack.c.bf16 %v292, %v292
      %v309 = vpack.c.bf16 %v293, %v293
      %v310 = vpack.c.bf16 %v294, %v294
      %v311 = vpack.c.bf16 %v295, %v295
      %v312 = vpack.c.bf16 %v296, %v296
      %v313 = vpack.c.bf16 %v297, %v297
      %v314 = vpack.c.bf16 %v298, %v298
      %v315 = vpack.c.bf16 %v299, %v299
      %v316 = vpack.c.bf16 %v300, %v300
      %v317 = vpack.c.bf16 %v301, %v301
      %v318 = vpack.c.bf16 %v302, %v302
      %v319 = vpack.c.bf16 %v303, %v303
      %v320 = vpack.c.bf16 %v304, %v304
      %v321 = vpack.c.bf16 %v305, %v305
      %v322 = vpack.c.bf16 %v306, %v306
      %v323 = vpack.c.bf16 %v307, %v307
      %324 = vst [vmem:[#allocation8] sm:$0xf] %v308
      %325 = vst [vmem:[#allocation8 + $0x4] sm:$0xf] %v309
      %326 = vst [vmem:[#allocation8 + $0x8] sm:$0xf] %v310
      %327 = vst [vmem:[#allocation8 + $0xc] sm:$0xf] %v311
      %328 = vst [vmem:[#allocation8 + $0x10] sm:$0xf] %v312
      %329 = vst [vmem:[#allocation8 + $0x14] sm:$0xf] %v313
      %330 = vst [vmem:[#allocation8 + $0x18] sm:$0xf] %v314
      %331 = vst [vmem:[#allocation8 + $0x1c] sm:$0xf] %v315
      %332 = vst [vmem:[#allocation8 + $0x20] sm:$0xf] %v316
      %333 = vst [vmem:[#allocation8 + $0x24] sm:$0xf] %v317
      %334 = vst [vmem:[#allocation8 + $0x28] sm:$0xf] %v318
      %335 = vst [vmem:[#allocation8 + $0x2c] sm:$0xf] %v319
      %336 = vst [vmem:[#allocation8 + $0x30] sm:$0xf] %v320
      %337 = vst [vmem:[#allocation8 + $0x34] sm:$0xf] %v321
      %338 = vst [vmem:[#allocation8 + $0x38] sm:$0xf] %v322
      %339 = vst [vmem:[#allocation8 + $0x3c] sm:$0xf] %v323
    $region25: #{tpu_custom_call.1} parent=1 // pred_fallthru
      _
    // Predicated region
    $region26: #{tpu_custom_call.1} parent=1 // pred_check
      _
    $region27: #{tpu_custom_call.1} parent=1 // pred_check_branch
      %341 = sbr.rel (0) target = $region29
    $region28: #{tpu_custom_call.1} parent=1 // pred_region
      %343 = vsyncadd [#allocation5], 0
      %s344 = sshll.u32 [#allocation8], 4
      %s345 = int_to_ptr.vmem [resolvable:$true] %s344
      %s346 = sshll.u32 %s2, 4
      %s347 = int_to_ptr.hbm [resolvable:$true] %s346
      %352 = dma.vmem_to_hbm [thread:$0]  %s345, 1024, %s347, [#allocation5], 64, 64, 4
    $region29: #{tpu_custom_call.1} parent=1 // pred_fallthru
      _
    // Predicated region
    $region30: #{tpu_custom_call.1} parent=1 // pred_check
      _
    $region31: #{tpu_custom_call.1} parent=1 // pred_check_branch
      %354 = sbr.rel (0) target = $region33
    $region32: #{tpu_custom_call.1} parent=1 // pred_region
      %356 = dma.done [#allocation5], 1024
    $region33: #{tpu_custom_call.1} parent=1 // pred_fallthru
      _
    %357 = vsyncpa [#allocation4], 1
    %358 = vsyncpa [#allocation7], 1
    %359 = vsyncpa [#allocation5], 1

</llo_original>
